<compile_context>
chip_gen: v6e
topology: v6e:2x2x1
jax: 0.10.0
libtpu: 0.0.40
codegen_flags: <defaults>
</compile_context>

<pallas_src>
import functools
import math
from typing import NamedTuple, Optional

import jax
import jax.numpy as jnp
from jax.experimental import pallas as pl
from jax.experimental.pallas import tpu as pltpu


# --------------------------------------------------------------------------
# helpers
# --------------------------------------------------------------------------
def _round_up(x, m):
    return (x + m - 1) // m * m


def _cdiv(a, b):
    return -(-a // b)


def _sublane_pack(dtype):
    # rows per packed sublane group: 8 (f32), 16 (bf16), 32 (int8/fp8)
    return max(8, 32 // jnp.dtype(dtype).itemsize)


def _balanced_tile(dim, target, align):
    """Largest tile <= target (aligned) that keeps total padding minimal."""
    dim = max(int(dim), 1)
    if dim <= target:
        return _round_up(dim, align)
    return _round_up(_cdiv(dim, _cdiv(dim, target)), align)


def _vmem_capacity_bytes():
    try:
        return int(pltpu.get_tpu_info().vmem_capacity_bytes)
    except Exception:
        return 64 << 20  # conservative: v7x per-TensorCore VMEM


def _vmem_needed(tm, tn, tk, x_item, w_item, o_item):
    # double-buffered x / weight / output tiles + bias row + f32 accumulator
    return (2 * tm * tk * x_item + 2 * tk * tn * w_item
            + 2 * tm * tn * o_item + 2 * tn * 4 + tm * tn * 4)


# --------------------------------------------------------------------------
# kernel
# --------------------------------------------------------------------------
def _equal_linear_kernel(x_ref, w_ref, b_ref, o_ref, acc_ref, *, scale):
    k = pl.program_id(2)

    # (tm, tk) @ (tk, tn) -> (tm, tn); weight is already (K, N) so the MXU
    # gets its canonical layout (no transpose anywhere).  Operands stay in
    # their input dtype (bf16 stays bf16); accumulate in f32.
    partial = jax.lax.dot_general(
        x_ref[...],
        w_ref[...],
        dimension_numbers=(((1,), (0,)), ((), ())),
        preferred_element_type=jnp.float32,
    )

    @pl.when(k == 0)
    def _first():
        # Direct write: skips the zero-init + first read-modify-write pass.
        acc_ref[...] = partial

    @pl.when(k > 0)
    def _accumulate():
        acc_ref[...] += partial

    @pl.when(k == pl.num_programs(2) - 1)
    def _finalize():
        # Equalized-lr scale + (lr_mul-prefolded) bias applied once, in f32.
        out = acc_ref[...] * scale + b_ref[...]
        o_ref[...] = out.astype(o_ref.dtype)


# --------------------------------------------------------------------------
# parameter preparation (one-time, per parameter set)
# --------------------------------------------------------------------------
class EqualLinearParams(NamedTuple):
    wt: jax.Array      # (k_pad, n_pad)  pre-transposed + padded weight
    b: jax.Array       # (1, n_pad)      f32 bias with lr_mul folded in
    scale: float       # equalized-lr scale, applied in the kernel epilogue
    n: int             # logical out_channels
    k: int             # logical in_channels
    tn: int
    tk: int


def prepare_equal_linear(weight, bias, *, lr_mul=1.0,
                         tn: Optional[int] = None, tk: Optional[int] = None,
                         compute_dtype=None) -> EqualLinearParams:
    """One-time param prep: transpose to (K, N), pad lane-dense, fold lr_mul."""
    N, K = weight.shape
    scale = lr_mul / math.sqrt(K)

    w = weight if compute_dtype is None else weight.astype(compute_dtype)
    w_item = jnp.dtype(w.dtype).itemsize

    # Dtype-aware tile targets (bf16 halves the bytes -> larger K tiles).
    tn_target = 1024
    tk_target = 2048 if w_item <= 2 else 1024
    if tn is None:
        tn = _balanced_tile(N, tn_target, 128)
    else:
        tn = _round_up(max(int(tn), 128), 128)
    if tk is None:
        tk = _balanced_tile(K, tk_target, 128)
    else:
        tk = _round_up(max(int(tk), 128), 128)

    n_pad = _round_up(N, tn)
    k_pad = _round_up(K, tk)

    # One-time transpose + pad of the parameter (never re-done per forward).
    # Zero padding is exact: padded K rows contribute 0 to the contraction.
    wt = w.T
    if (k_pad, n_pad) != (K, N):
        wt = jnp.pad(wt, ((0, k_pad - K), (0, n_pad - N)))

    # lr_mul folded into the bias once, kept f32 for the f32 epilogue.
    b = jnp.pad(bias.astype(jnp.float32) * lr_mul, (0, n_pad - N))
    b = b.reshape(1, n_pad)

    return EqualLinearParams(wt=wt, b=b, scale=scale, n=N, k=K, tn=tn, tk=tk)


# --------------------------------------------------------------------------
# per-call apply
# --------------------------------------------------------------------------
def equal_linear_apply(params: EqualLinearParams, x, *, tm: Optional[int] = None):
    """out = x @ (weight * scale)^T + bias * lr_mul, using prepared params."""
    orig_shape = x.shape
    out_dtype = x.dtype
    K, N = params.k, params.n
    assert orig_shape[-1] == K, "in_channels mismatch"

    x2 = x.reshape(-1, K)
    if x2.dtype != params.wt.dtype:
        x2 = x2.astype(params.wt.dtype)      # bf16 compute path (if requested)
    M = x2.shape[0]

    k_pad, n_pad = params.wt.shape
    tn, tk = params.tn, params.tk

    x_item = jnp.dtype(x2.dtype).itemsize
    w_item = jnp.dtype(params.wt.dtype).itemsize
    o_item = jnp.dtype(out_dtype).itemsize

    # Sublane-pack-aware, padding-balanced M tile.
    pack = _sublane_pack(x2.dtype)
    if tm is None:
        tm = _balanced_tile(M, 512, pack)
    else:
        tm = _round_up(max(int(tm), pack), pack)

    # VMEM budget: cap from hardware info, with headroom for compiler scratch.
    cap = _vmem_capacity_bytes()
    budget = max(cap - (8 << 20), 16 << 20)
    while _vmem_needed(tm, tn, tk, x_item, w_item, o_item) > budget and tm > pack:
        tm = max(pack, _round_up(tm // 2, pack))

    m_pad = _round_up(M, tm)

    # Megacore (v7x has 2 TensorCores): make sure the parallel grid dims have
    # at least 2 blocks; halving tn keeps n_pad divisibility (n_pad % tn == 0).
    if (m_pad // tm) * (n_pad // tn) < 2 and (tn // 2) % 128 == 0:
        tn //= 2

    # Only x is padded per call (cheap: M*K); weight/bias were padded at init.
    xp = x2 if (m_pad, k_pad) == (M, K) else jnp.pad(
        x2, ((0, m_pad - M), (0, k_pad - K)))

    grid = (m_pad // tm, n_pad // tn, k_pad // tk)

    needed = _vmem_needed(tm, tn, tk, x_item, w_item, o_item)
    vmem_limit = int(min(budget, max(needed + (4 << 20), 32 << 20)))

    # bytes_accessed reflects re-streaming: x read once per N tile, weight
    # once per M tile under this (i, j, k) grid.
    cost = pl.CostEstimate(
        flops=2 * M * N * K,
        transcendentals=0,
        bytes_accessed=int(
            m_pad * k_pad * x_item * (n_pad // tn)
            + k_pad * n_pad * w_item * (m_pad // tm)
            + n_pad * 4 * (m_pad // tm)
            + m_pad * n_pad * o_item),
    )

    kernel = functools.partial(_equal_linear_kernel, scale=params.scale)

    out_padded = pl.pallas_call(
        kernel,
        out_shape=jax.ShapeDtypeStruct((m_pad, n_pad), out_dtype),
        grid_spec=pltpu.PrefetchScalarGridSpec(
            num_scalar_prefetch=0,
            grid=grid,
            in_specs=[
                pl.BlockSpec((tm, tk), lambda i, j, k: (i, k)),   # x tile
                pl.BlockSpec((tk, tn), lambda i, j, k: (k, j)),   # w (K,N) tile
                pl.BlockSpec((1, tn), lambda i, j, k: (0, j)),    # bias row
            ],
            out_specs=pl.BlockSpec((tm, tn), lambda i, j, k: (i, j)),
            scratch_shapes=[pltpu.VMEM((tm, tn), jnp.float32)],
        ),
        compiler_params=pltpu.CompilerParams(
            dimension_semantics=("parallel", "parallel", "arbitrary"),
            vmem_limit_bytes=vmem_limit,
        ),
        cost_estimate=cost,
    )(xp, params.wt, params.b)

    out = out_padded[:M, :N] if (m_pad, n_pad) != (M, N) else out_padded
    if len(orig_shape) != 2:
        out = out.reshape(*orig_shape[:-1], N)
    return out


# --------------------------------------------------------------------------
# one-shot convenience wrapper (prep + apply in one call)
# --------------------------------------------------------------------------
def equal_linear(x, weight, bias, *, lr_mul=1.0, tm=None, tn=None, tk=None,
                 compute_dtype=None):
    params = prepare_equal_linear(weight, bias, lr_mul=lr_mul, tn=tn, tk=tk,
                                  compute_dtype=compute_dtype)
    return equal_linear_apply(params, x, tm=tm)


# --------------------------------------------------------------------------
# pure-JAX reference
# --------------------------------------------------------------------------
def equal_linear_ref(x, weight, bias, *, lr_mul=1.0):
    scale = lr_mul / math.sqrt(x.shape[-1])
    out = jax.lax.dot_general(
        x.astype(jnp.float32), (weight * scale).astype(jnp.float32),
        dimension_numbers=(((x.ndim - 1,), (1,)), ((), ())),
        precision=jax.lax.Precision.HIGHEST,
        preferred_element_type=jnp.float32,
    )
    return (out + bias.astype(jnp.float32) * lr_mul).astype(x.dtype)


if __name__ == "__main__":
    key = jax.random.PRNGKey(0)
    k_x, k_w, k_x2, k_w2, k_b2, k_x3, k_w3, k_b3 = jax.random.split(key, 8)

    # --- Test 1: nominal small shapes, prepare-once / apply path ------------
    batch, in_channels, out_channels = 8, 32, 64
    lr_mul = 1.0
    bias_init_val = 0.0

    # Mirror the PyTorch __init__: weight = randn(out, in)/lr_mul, bias = fill.
    weight = (jax.random.normal(k_w, (out_channels, in_channels), jnp.float32)
              / lr_mul)
    bias = jnp.full((out_channels,), bias_init_val, jnp.float32)
    x = jax.random.normal(k_x, (batch, in_channels), jnp.float32)

    params = prepare_equal_linear(weight, bias, lr_mul=lr_mul)   # hoisted prep
    out = jax.block_until_ready(equal_linear_apply(params, x))
    ref = equal_linear_ref(x, weight, bias, lr_mul=lr_mul)
    assert out.shape == (batch, out_channels)
    assert jnp.allclose(out, ref, atol=2e-3, rtol=2e-3), "mismatch (test 1)"

    # --- Test 2: ragged shapes + lr_mul != 1, multi-tile M/N/K accumulator --
    b2, in2, out2, lr2 = 10, 200, 130, 0.5
    w2 = jax.random.normal(k_w2, (out2, in2), jnp.float32) / lr2
    bi2 = jax.random.normal(k_b2, (out2,), jnp.float32)
    x2 = jax.random.normal(k_x2, (b2, in2), jnp.float32)

    out2_v = jax.block_until_ready(
        equal_linear(x2, w2, bi2, lr_mul=lr2, tm=8, tn=128, tk=128))
    ref2 = equal_linear_ref(x2, w2, bi2, lr_mul=lr2)
    assert out2_v.shape == (b2, out2)
    assert jnp.allclose(out2_v, ref2, atol=2e-3, rtol=2e-3), "mismatch (test 2)"

    # --- Test 3: bf16 compute path (bf16 MXU operands, f32 accumulate) ------
    b3, in3, out3 = 16, 128, 128
    w3 = jax.random.normal(k_w3, (out3, in3), jnp.float32)
    bi3 = jax.random.normal(k_b3, (out3,), jnp.float32)
    x3 = jax.random.normal(k_x3, (b3, in3), jnp.float32)

    p3 = prepare_equal_linear(w3, bi3, lr_mul=1.0, compute_dtype=jnp.bfloat16)
    out3_v = jax.block_until_ready(equal_linear_apply(p3, x3))
    ref3 = equal_linear_ref(x3, w3, bi3, lr_mul=1.0)
    assert out3_v.shape == (b3, out3)
    assert jnp.allclose(out3_v, ref3, atol=5e-2, rtol=5e-2), "mismatch (test 3)"

    print("KERNEL_OK")
</pallas_src>

<mosaic_0001>
module attributes {stable_mosaic.version = 11 : i64} {
  func.func @_equal_linear_kernel(%arg0: i32, %arg1: i32, %arg2: i32, %arg3: memref<8x128xf32, #tpu.memory_space<vmem>>, %arg4: memref<128x128xf32, #tpu.memory_space<vmem>>, %arg5: memref<1x128xf32, #tpu.memory_space<vmem>>, %arg6: memref<8x128xf32, #tpu.memory_space<vmem>>, %arg7: memref<8x128xf32, #tpu.memory_space<vmem>>) attributes {dimension_semantics = [#tpu.dimension_semantics<parallel>, #tpu.dimension_semantics<parallel>, #tpu.dimension_semantics<arbitrary>], iteration_bounds = array<i64: 1, 1, 1>, scalar_prefetch = 0 : i64, scratch_operands = 1 : i64, tpu.core_type = #tpu.core_type<tc>, window_params = [{transform_indices = @transform_0, window_bounds = array<i64: 8, 128>}, {transform_indices = @transform_1, window_bounds = array<i64: 128, 128>}, {transform_indices = @transform_2, window_bounds = array<i64: 1, 128>}, {transform_indices = @transform_3, window_bounds = array<i64: 8, 128>}]} {
    %c0 = arith.constant 0 : index
    %c0_0 = arith.constant 0 : index
    %0 = vector.load %arg3[%c0, %c0_0] : memref<8x128xf32, #tpu.memory_space<vmem>>, vector<8x128xf32>
    %c0_1 = arith.constant 0 : index
    %c0_2 = arith.constant 0 : index
    %1 = vector.load %arg4[%c0_1, %c0_2] : memref<128x128xf32, #tpu.memory_space<vmem>>, vector<128x128xf32>
    %cst = arith.constant dense<0.000000e+00> : vector<8x128xf32>
    %2 = tpu.matmul %0, %1, %cst {dimension_numbers = #tpu.dot_dimension_numbers<[1], [0], [0], [1], [0, 0, 1, 1], [], []>} : vector<8x128xf32>, vector<128x128xf32>, vector<8x128xf32> -> vector<8x128xf32>
    %c0_i32 = arith.constant 0 : i32
    %3 = arith.cmpi eq, %arg2, %c0_i32 : i32
    %4 = arith.extui %3 : i1 to i32
    %c0_i32_3 = arith.constant 0 : i32
    %5 = arith.cmpi ne, %4, %c0_i32_3 : i32
    scf.if %5 {
      %c0_8 = arith.constant 0 : index
      %c0_9 = arith.constant 0 : index
      %12 = vector.load %arg7[%c0_8, %c0_9] : memref<8x128xf32, #tpu.memory_space<vmem>>, vector<8x128xf32>
      tpu.vector_store %arg7[%c0_8, %c0_9], %2 {strides = array<i32>} : memref<8x128xf32, #tpu.memory_space<vmem>>, vector<8x128xf32>,
    } else {
    }
    %c0_i32_4 = arith.constant 0 : i32
    %6 = arith.cmpi sgt, %arg2, %c0_i32_4 : i32
    %7 = arith.extui %6 : i1 to i32
    %c0_i32_5 = arith.constant 0 : i32
    %8 = arith.cmpi ne, %7, %c0_i32_5 : i32
    scf.if %8 {
      %c0_8 = arith.constant 0 : index
      %c0_9 = arith.constant 0 : index
      %12 = vector.load %arg7[%c0_8, %c0_9] : memref<8x128xf32, #tpu.memory_space<vmem>>, vector<8x128xf32>
      %13 = arith.addf %12, %2 : vector<8x128xf32>
      %c0_10 = arith.constant 0 : index
      %c0_11 = arith.constant 0 : index
      %14 = vector.load %arg7[%c0_10, %c0_11] : memref<8x128xf32, #tpu.memory_space<vmem>>, vector<8x128xf32>
      tpu.vector_store %arg7[%c0_10, %c0_11], %13 {strides = array<i32>} : memref<8x128xf32, #tpu.memory_space<vmem>>, vector<8x128xf32>,
    } else {
    }
    %c0_i32_6 = arith.constant 0 : i32
    %9 = arith.cmpi eq, %arg2, %c0_i32_6 : i32
    %10 = arith.extui %9 : i1 to i32
    %c0_i32_7 = arith.constant 0 : i32
    %11 = arith.cmpi ne, %10, %c0_i32_7 : i32
    scf.if %11 {
      %c0_8 = arith.constant 0 : index
      %c0_9 = arith.constant 0 : index
      %12 = vector.load %arg7[%c0_8, %c0_9] : memref<8x128xf32, #tpu.memory_space<vmem>>, vector<8x128xf32>
      %cst_10 = arith.constant 0.176776692 : f32
      %13 = vector.broadcast %cst_10 : f32 to vector<8x128xf32>
      %14 = arith.mulf %12, %13 : vector<8x128xf32>
      %c0_11 = arith.constant 0 : index
      %c0_12 = arith.constant 0 : index
      %15 = vector.load %arg5[%c0_11, %c0_12] : memref<1x128xf32, #tpu.memory_space<vmem>>, vector<1x128xf32>
      %16 = vector.broadcast %15 : vector<1x128xf32> to vector<8x128xf32>
      %17 = arith.addf %14, %16 : vector<8x128xf32>
      %c0_13 = arith.constant 0 : index
      %c0_14 = arith.constant 0 : index
      %18 = vector.load %arg6[%c0_13, %c0_14] : memref<8x128xf32, #tpu.memory_space<vmem>>, vector<8x128xf32>
      tpu.vector_store %arg6[%c0_13, %c0_14], %17 {strides = array<i32>} : memref<8x128xf32, #tpu.memory_space<vmem>>, vector<8x128xf32>,
    } else {
    }
    return
  }
  func.func @transform_0(%arg0: i32, %arg1: i32, %arg2: i32) -> (i32, i32) {
    %c0_i32 = arith.constant 0 : i32
    return %arg0, %arg2 : i32, i32
  }
  func.func @transform_1(%arg0: i32, %arg1: i32, %arg2: i32) -> (i32, i32) {
    %c0_i32 = arith.constant 0 : i32
    return %arg2, %arg1 : i32, i32
  }
  func.func @transform_2(%arg0: i32, %arg1: i32, %arg2: i32) -> (i32, i32) {
    %c0_i32 = arith.constant 0 : i32
    %c0_i32_0 = arith.constant 0 : i32
    return %c0_i32, %arg1 : i32, i32
  }
  func.func @transform_3(%arg0: i32, %arg1: i32, %arg2: i32) -> (i32, i32) {
    %c0_i32 = arith.constant 0 : i32
    return %arg0, %arg1 : i32, i32
  }
}

</mosaic_0001>

<llo_original>
// kernel: tpu_custom_call.1
$region0: #{tpu_custom_call.1}
  #allocation0 [shape = 'u32[]', space=smem, size = 0x4, offset = 0x4, fixed_abs, tag = 'smem constant byte address 0x4 - core index']
  #allocation1 [shape = 'u32[144,128]{1,0:T(1,128)}', space=vmem, size = 0x12000, scoped, tag = 'internal scratch']
  #allocation2 [shape = 'f32[8,128]{1,0:T(8,128)}', space=vmem, size = 0x1000, scoped, tag = 'scratch operand']
  %s0 = inlined_call_operand.hbm [shape: f32[8,128], index: 0, kind: input, shape index: {}]
  %s1 = inlined_call_operand.hbm [shape: f32[128,128], index: 1, kind: input, shape index: {}]
  %s2 = inlined_call_operand.vmem [shape: f32[1,128], index: 2, kind: input, shape index: {}]
  %s3 = inlined_call_operand.hbm [shape: f32[8,128], index: 3, kind: output, shape index: {}]
  %s4 = sld [smem:[#allocation0]]
  $region42: #{tpu_custom_call.1} parent=0
    _
  %s6 = ssub.s32 1, %s4
  %s7 = scalar_select 0, %s6, %s4
  $region1: #{tpu_custom_call.1} parent=0
    #allocation3 [shape = 'u8[4096]{0}', space=vmem, size = 0x1000, scoped, tag = 'input window, operand 0, single buffered']
    #allocation4 [shape = 's32[1]{0}', space=sflag, size = 0x4, scoped, tag = 'scoped memory for tpu_custom_call.1']
    #allocation5 [shape = 's32[1]{0}', space=sflag, size = 0x4, scoped, tag = 'scoped memory for tpu_custom_call.1']
    #allocation6 [shape = 'u8[65536]{0}', space=vmem, size = 0x10000, scoped, tag = 'input window, operand 1, single buffered']
    #allocation7 [shape = 's32[1]{0}', space=sflag, size = 0x4, scoped, tag = 'scoped memory for tpu_custom_call.1']
    #allocation8 [shape = 'u8[4096]{0}', space=vmem, size = 0x1000, scoped, tag = 'output window, operand 0, single buffered']
    %8 = vsyncpa [#allocation4], 0
    %9 = vsyncpa [#allocation7], 0
    %10 = vsyncpa [#allocation5], 0
    // Predicated region
    $region2: #{tpu_custom_call.1} parent=1 // pred_check
      _
    $region3: #{tpu_custom_call.1} parent=1 // pred_check_branch
      %12 = sbr.rel (0) target = $region5
    $region4: #{tpu_custom_call.1} parent=1 // pred_region
      %s14 = ssub.s32 128, 128
      %15 = vsyncadd [#allocation4], %s14
      %s17 = sshll.u32 [#allocation3], 4
      %s18 = int_to_ptr.vmem [resolvable:$true] %s17
      %20 = dma.hbm_to_vmem [thread:$0]  %s0, 128, %s18, [#allocation4]
    $region5: #{tpu_custom_call.1} parent=1 // pred_fallthru
      _
    // Predicated region
    $region6: #{tpu_custom_call.1} parent=1 // pred_check
      _
    $region7: #{tpu_custom_call.1} parent=1 // pred_check_branch
      %22 = sbr.rel (0) target = $region9
    $region8: #{tpu_custom_call.1} parent=1 // pred_region
      %s24 = ssub.s32 2048, 2048
      %25 = vsyncadd [#allocation7], %s24
      %s26 = sshll.u32 [#allocation6], 4
      %s27 = int_to_ptr.vmem [resolvable:$true] %s26
      %32 = dma.hbm_to_vmem [thread:$0]  %s1, 2048, %s27, [#allocation7], 128, 128, 8
    $region9: #{tpu_custom_call.1} parent=1 // pred_fallthru
      _
    // Predicated region
    $region10: #{tpu_custom_call.1} parent=1 // pred_check
      _
    $region11: #{tpu_custom_call.1} parent=1 // pred_check_branch
      %34 = sbr.rel (0) target = $region13
    $region12: #{tpu_custom_call.1} parent=1 // pred_region
      _
    $region13: #{tpu_custom_call.1} parent=1 // pred_fallthru
      _
    // Predicated region
    $region14: #{tpu_custom_call.1} parent=1 // pred_check
      _
    $region15: #{tpu_custom_call.1} parent=1 // pred_check_branch
      %36 = sbr.rel (0) target = $region17
    $region16: #{tpu_custom_call.1} parent=1 // pred_region
      %37 = dma.done [#allocation4], 128
    $region17: #{tpu_custom_call.1} parent=1 // pred_fallthru
      _
    // Predicated region
    $region18: #{tpu_custom_call.1} parent=1 // pred_check
      _
    $region19: #{tpu_custom_call.1} parent=1 // pred_check_branch
      %39 = sbr.rel (0) target = $region21
    $region20: #{tpu_custom_call.1} parent=1 // pred_region
      %40 = dma.done [#allocation7], 2048
    $region21: #{tpu_custom_call.1} parent=1 // pred_fallthru
      _
    %v41 = vld [vmem:[#allocation3] sm:$0xff]
    %v42 = vld [vmem:[#allocation6] sm:$0xff]
    %v43 = vld [vmem:[#allocation6 + $0x8] sm:$0xff]
    %v44 = vld [vmem:[#allocation6 + $0x10] sm:$0xff]
    %v45 = vld [vmem:[#allocation6 + $0x18] sm:$0xff]
    %v46 = vld [vmem:[#allocation6 + $0x20] sm:$0xff]
    %v47 = vld [vmem:[#allocation6 + $0x28] sm:$0xff]
    %v48 = vld [vmem:[#allocation6 + $0x30] sm:$0xff]
    %v49 = vld [vmem:[#allocation6 + $0x38] sm:$0xff]
    %v50 = vld [vmem:[#allocation6 + $0x40] sm:$0xff]
    %v51 = vld [vmem:[#allocation6 + $0x48] sm:$0xff]
    %v52 = vld [vmem:[#allocation6 + $0x50] sm:$0xff]
    %v53 = vld [vmem:[#allocation6 + $0x58] sm:$0xff]
    %v54 = vld [vmem:[#allocation6 + $0x60] sm:$0xff]
    %v55 = vld [vmem:[#allocation6 + $0x68] sm:$0xff]
    %v56 = vld [vmem:[#allocation6 + $0x70] sm:$0xff]
    %v57 = vld [vmem:[#allocation6 + $0x78] sm:$0xff]
    %58 = vmatprep.subr.mxu0 0.0
    %59 = vmatpush1.msra.mxu0 %v57
    %60 = vmatprep.subr.mxu0 0.0
    %61 = vmatpush1.msra.mxu0 %v56
    %62 = vmatprep.subr.mxu0 0.0
    %63 = vmatpush1.msra.mxu0 %v55
    %64 = vmatprep.subr.mxu0 0.0
    %65 = vmatpush1.msra.mxu0 %v54
    %66 = vmatprep.subr.mxu0 0.0
    %67 = vmatpush1.msra.mxu0 %v53
    %68 = vmatprep.subr.mxu0 0.0
    %69 = vmatpush1.msra.mxu0 %v52
    %70 = vmatprep.subr.mxu0 0.0
    %71 = vmatpush1.msra.mxu0 %v51
    %72 = vmatprep.subr.mxu0 0.0
    %73 = vmatpush1.msra.mxu0 %v50
    %74 = vmatprep.subr.mxu0 0.0
    %75 = vmatpush1.msra.mxu0 %v49
    %76 = vmatprep.subr.mxu0 0.0
    %77 = vmatpush1.msra.mxu0 %v48
    %78 = vmatprep.subr.mxu0 0.0
    %79 = vmatpush1.msra.mxu0 %v47
    %80 = vmatprep.subr.mxu0 0.0
    %81 = vmatpush1.msra.mxu0 %v46
    %82 = vmatprep.subr.mxu0 0.0
    %83 = vmatpush1.msra.mxu0 %v45
    %84 = vmatprep.subr.mxu0 0.0
    %85 = vmatpush1.msra.mxu0 %v44
    %86 = vmatprep.subr.mxu0 0.0
    %87 = vmatpush1.msra.mxu0 %v43
    %88 = vmatprep.subr.mxu0 0.0
    %89 = vmatpush1.msra.mxu0 %v42
    %90 = vmatprep.subr.mxu0 0.0
    %91 = vmatpush2.msra.mxu0 0.0
    %92 = vmatprep.subr.mxu0 0.0
    %93 = vmatpush2.msra.mxu0 0.0
    %94 = vmatprep.subr.mxu0 0.0
    %95 = vmatpush2.msra.mxu0 0.0
    %96 = vmatprep.subr.mxu0 0.0
    %97 = vmatpush2.msra.mxu0 0.0
    %98 = vmatprep.subr.mxu0 0.0
    %99 = vmatpush2.msra.mxu0 0.0
    %100 = vmatprep.subr.mxu0 0.0
    %101 = vmatpush2.msra.mxu0 0.0
    %102 = vmatprep.subr.mxu0 0.0
    %103 = vmatpush2.msra.mxu0 0.0
    %104 = vmatprep.subr.mxu0 0.0
    %105 = vmatpush2.msra.mxu0 0.0
    %106 = vmatprep.subr.mxu0 0.0
    %107 = vmatpush2.msra.mxu0 0.0
    %108 = vmatprep.subr.mxu0 0.0
    %109 = vmatpush2.msra.mxu0 0.0
    %110 = vmatprep.subr.mxu0 0.0
    %111 = vmatpush2.msra.mxu0 0.0
    %112 = vmatprep.subr.mxu0 0.0
    %113 = vmatpush2.msra.mxu0 0.0
    %114 = vmatprep.subr.mxu0 0.0
    %115 = vmatpush2.msra.mxu0 0.0
    %116 = vmatprep.subr.mxu0 0.0
    %117 = vmatpush2.msra.mxu0 0.0
    %118 = vmatprep.subr.mxu0 0.0
    %119 = vmatpush2.msra.mxu0 0.0
    %120 = vmatprep.subr.mxu0 0.0
    %121 = vmatpush2.msra.mxu0 0.0
    %122 = vmatprep.mubr.f32.mxu0 0.0
    %123 = vmatmul.mubr.f32.gmra.mxu0 %v41
    %v124 = vpop.f32.mrf.mxu0
    %v125 = vadd.f32 0.0, %v124
    %v126 = vpop.f32.mrf.mxu0
    %127 = vdwg.mxu0
    %p128 = scmp.eq.s32.totalorder 0, 0
    // Predicated region
    $region22: #{tpu_custom_call.1} parent=1 // pred_check
      %p129 = pneg %p128
    $region23: #{tpu_custom_call.1} parent=1 // pred_check_branch
      %131 = sbr.rel (%p129) target = $region25
    $region24: #{tpu_custom_call.1} parent=1 // pred_region
      %132 = vst [vmem:[#allocation2] sm:$0xff] %v125
    $region25: #{tpu_custom_call.1} parent=1 // pred_fallthru
      _
    %p133 = scmp.gt.s32.totalorder 0, 0
    // Predicated region
    $region26: #{tpu_custom_call.1} parent=1 // pred_check
      %p134 = pneg %p133
    $region27: #{tpu_custom_call.1} parent=1 // pred_check_branch
      %136 = sbr.rel (%p134) target = $region29
    $region28: #{tpu_custom_call.1} parent=1 // pred_region
      %v137 = vld [vmem:[#allocation2] sm:$0xff]
      %v138 = vadd.f32 %v137, %v125
      %139 = vst [vmem:[#allocation2] sm:$0xff] %v138
    $region29: #{tpu_custom_call.1} parent=1 // pred_fallthru
      _
    // Predicated region
    $region30: #{tpu_custom_call.1} parent=1 // pred_check
      %p140 = pneg %p128
    $region31: #{tpu_custom_call.1} parent=1 // pred_check_branch
      %142 = sbr.rel (%p140) target = $region33
    $region32: #{tpu_custom_call.1} parent=1 // pred_region
      %v143 = vld [vmem:[#allocation2] sm:$0xff]
      %v144 = vmul.f32 %v143, 0.17677669
      %v145 = vld [vmem:[%s2] sm:$0x1]
      %v147 = vlaneseq
      %v148 = vshrl.u32 %v147, 7
      %v149 = vsub.s32 0, %v148
      %v150 = vrot.slane %v145, %v149
      %v152 = vadd.f32 %v144, %v150
      %153 = vst [vmem:[#allocation8] sm:$0xff] %v152
    $region33: #{tpu_custom_call.1} parent=1 // pred_fallthru
      _
    // Predicated region
    $region34: #{tpu_custom_call.1} parent=1 // pred_check
      _
    $region35: #{tpu_custom_call.1} parent=1 // pred_check_branch
      %155 = sbr.rel (0) target = $region37
    $region36: #{tpu_custom_call.1} parent=1 // pred_region
      %s157 = ssub.s32 128, 128
      %158 = vsyncadd [#allocation5], %s157
      %s160 = sshll.u32 [#allocation8], 4
      %s161 = int_to_ptr.vmem [resolvable:$true] %s160
      %163 = dma.vmem_to_hbm [thread:$0]  %s161, 128, %s3, [#allocation5]
    $region37: #{tpu_custom_call.1} parent=1 // pred_fallthru
      _
    // Predicated region
    $region38: #{tpu_custom_call.1} parent=1 // pred_check
      _
    $region39: #{tpu_custom_call.1} parent=1 // pred_check_branch
      %165 = sbr.rel (0) target = $region41
    $region40: #{tpu_custom_call.1} parent=1 // pred_region
      %166 = dma.done [#allocation5], 128
    $region41: #{tpu_custom_call.1} parent=1 // pred_fallthru
      _
    %167 = vsyncpa [#allocation4], 1
    %168 = vsyncpa [#allocation7], 1
    %169 = vsyncpa [#allocation5], 1

</llo_original>
